<compile_context>
chip_gen: v5e
topology: v5e:2x2
jax: 0.10.0
libtpu: 0.0.40
codegen_flags: <defaults>
</compile_context>

<pallas_src>
import jax
import jax.numpy as jnp
from jax.experimental import pallas as pl
from jax.experimental.pallas import tpu as pltpu

HIDDEN = 128
NEG_INF = -1e30


def _round_up(n, m):
    return ((n + m - 1) // m) * m


def _default_num_tiles():
    # v7x has 2 TensorCores per chip -> split the batch into 2 balanced tiles.
    # v5e / v6e (and CPU interpret) -> a single grid step is strictly cheaper.
    try:
        kind = jax.devices()[0].device_kind.lower()
        if "v7" in kind:
            return 2
    except Exception:
        pass
    return 1


# ----------------------------------------------------------------------------
# Pallas kernel factory: whole MLP forward for one [TM, K] row tile.
# Single lane-dense output [TM, N_PAD]: lanes [0, nb_actions) = action probs,
# lane nb_actions = tanh(value), remaining lanes = 0.
# ----------------------------------------------------------------------------
def _make_fcnn_kernel(nb_actions):
    def kernel(x_ref, w1_ref, b1_ref, w2_ref, b2_ref, wh_ref, bh_ref, out_ref):
        x = x_ref[...]                                              # [TM, K]

        # fc1 + relu : [TM, 128]
        h1 = jnp.dot(x, w1_ref[...], preferred_element_type=jnp.float32) + b1_ref[...]
        h1 = jnp.maximum(h1, 0.0)

        # fc2 + relu : [TM, 128]
        h2 = jnp.dot(h1, w2_ref[...], preferred_element_type=jnp.float32) + b2_ref[...]
        h2 = jnp.maximum(h2, 0.0)

        # fused action+value head : [TM, N_PAD]
        head = jnp.dot(h2, wh_ref[...], preferred_element_type=jnp.float32) + bh_ref[...]

        lanes = jax.lax.broadcasted_iota(jnp.int32, head.shape, 1)

        # softmax over the real action lanes only (value + padding masked out).
        # Exact division: nothing here is EUP/VALU bound, and it guarantees
        # rows sum to 1.0 within f32 rounding.
        logits = jnp.where(lanes < nb_actions, head, NEG_INF)
        m = jnp.max(logits, axis=-1, keepdims=True)
        e = jnp.exp(logits - m)
        denom = jnp.sum(e, axis=-1, keepdims=True)
        probs = e / denom

        # value lane only: tanh on the single [TM, 1] column (not the full tile)
        val_col = jnp.tanh(head[:, nb_actions:nb_actions + 1])     # [TM, 1]

        out_ref[...] = jnp.where(lanes == nb_actions, val_col, probs)

    return kernel


# ----------------------------------------------------------------------------
# Parameter init (matches nn.Linear default: U(-1/sqrt(fan_in), +)), stored
# as [in, out] (torch weight.T).
# ----------------------------------------------------------------------------
def init_params(key, nb_case, nb_actions, hidden=HIDDEN):
    def linear(key, fan_in, fan_out):
        kw, kb = jax.random.split(key)
        bound = 1.0 / jnp.sqrt(jnp.float32(fan_in))
        w = jax.random.uniform(kw, (fan_in, fan_out), jnp.float32, -bound, bound)
        b = jax.random.uniform(kb, (fan_out,), jnp.float32, -bound, bound)
        return w, b

    k1, k2, k3, k4 = jax.random.split(key, 4)
    w1, b1 = linear(k1, nb_case, hidden)        # fc1
    w2, b2 = linear(k2, hidden, hidden)         # fc2
    wa, ba = linear(k3, hidden, nb_actions)     # action_head
    wv, bv = linear(k4, hidden, 1)              # value_head
    return (w1, b1, w2, b2, wa, ba, wv, bv)


# ----------------------------------------------------------------------------
# Pack parameters for the kernel:
#   w1 : [K, 128]       K = nb_case rounded up to a multiple of 8 (no 128 pad)
#   wh : [128, N_PAD]   (action columns | value column | zero padding)
#   bh : [1, N_PAD]     (action bias   | value bias    | zeros)
# ----------------------------------------------------------------------------
def pack_params(params, nb_case, nb_actions, hidden=HIDDEN):
    w1, b1, w2, b2, wa, ba, wv, bv = params
    k_pad = _round_up(nb_case, 8)                       # sublane alignment only
    n_pad = max(128, _round_up(nb_actions + 1, 128))

    if k_pad == nb_case:
        w1p = w1.astype(jnp.float32)
    else:
        w1p = jnp.zeros((k_pad, hidden), jnp.float32).at[:nb_case, :].set(w1)

    b1p = b1.reshape(1, hidden).astype(jnp.float32)
    b2p = b2.reshape(1, hidden).astype(jnp.float32)

    wh = jnp.zeros((hidden, n_pad), jnp.float32)
    wh = wh.at[:, :nb_actions].set(wa)
    wh = wh.at[:, nb_actions:nb_actions + 1].set(wv)

    bh = jnp.zeros((1, n_pad), jnp.float32)
    bh = bh.at[0, :nb_actions].set(ba)
    bh = bh.at[0, nb_actions].set(bv[0])

    return (w1p, b1p, w2.astype(jnp.float32), b2p, wh, bh)


# ----------------------------------------------------------------------------
# Batched forward: xb [B, nb_case] -> (probs [B, nb_actions], value [B, 1])
# ----------------------------------------------------------------------------
def fcnn_forward_batch(xb, packed, nb_case, nb_actions, num_tiles=None):
    w1p, b1p, w2, b2p, wh, bh = packed
    k_pad = w1p.shape[0]
    hidden = w1p.shape[1]
    n_pad = wh.shape[1]

    B = xb.shape[0]
    if num_tiles is None:
        num_tiles = _default_num_tiles()
    num_tiles = max(1, min(int(num_tiles), pl.cdiv(B, 8)))

    # Balanced row tiles, padded only to a multiple of 8 (no 128-row padding,
    # no K-dim padding beyond sublane alignment).
    tm = _round_up(pl.cdiv(B, num_tiles), 8)
    b_pad = tm * num_tiles

    xp = xb.astype(jnp.float32)
    if b_pad != B or k_pad != nb_case:
        xp = jnp.pad(xp, ((0, b_pad - B), (0, k_pad - nb_case)))

    out = pl.pallas_call(
        _make_fcnn_kernel(nb_actions),
        out_shape=jax.ShapeDtypeStruct((b_pad, n_pad), jnp.float32),
        grid=(num_tiles,),
        in_specs=[
            pl.BlockSpec((tm, k_pad), lambda i: (i, 0)),        # x tile
            pl.BlockSpec((k_pad, hidden), lambda i: (0, 0)),    # w1 (resident)
            pl.BlockSpec((1, hidden), lambda i: (0, 0)),        # b1
            pl.BlockSpec((hidden, hidden), lambda i: (0, 0)),   # w2
            pl.BlockSpec((1, hidden), lambda i: (0, 0)),        # b2
            pl.BlockSpec((hidden, n_pad), lambda i: (0, 0)),    # fused head W
            pl.BlockSpec((1, n_pad), lambda i: (0, 0)),         # fused head b
        ],
        out_specs=pl.BlockSpec((tm, n_pad), lambda i: (i, 0)),
        compiler_params=pltpu.CompilerParams(
            dimension_semantics=("parallel",)),
    )(xp, w1p, b1p, w2, b2p, wh, bh)

    # One slice over the padded output, then cheap splits of the small result.
    fused = jax.lax.slice(out, (0, 0), (B, nb_actions + 1))
    probs = fused[:, :nb_actions]
    value = fused[:, nb_actions:]
    return probs, value


# ----------------------------------------------------------------------------
# Single-state forward (matches the torch module's unbatched semantics:
# 1-D state, softmax over dim=0 == over the action axis).  Do NOT call this
# per-state in a hot loop -- batch leaf evaluations through
# fcnn_forward_batch instead (launch overhead dominates at this size).
# ----------------------------------------------------------------------------
def fcnn_forward(x, packed, nb_case, nb_actions):
    probs, value = fcnn_forward_batch(x.reshape(1, -1), packed, nb_case,
                                      nb_actions, num_tiles=1)
    return probs[0], value[0]


# ----------------------------------------------------------------------------
# Pure-JAX reference (unpadded params) for correctness checks.
# ----------------------------------------------------------------------------
def fcnn_reference_batch(xb, params):
    w1, b1, w2, b2, wa, ba, wv, bv = params
    h1 = jnp.maximum(xb @ w1 + b1, 0.0)
    h2 = jnp.maximum(h1 @ w2 + b2, 0.0)
    logits = h2 @ wa + ba
    probs = jax.nn.softmax(logits, axis=-1)     # per-state softmax over actions
    value = jnp.tanh(h2 @ wv + bv)              # [B, 1]
    return probs, value


if __name__ == "__main__":
    # Small synthetic "game": e.g. a hex board with nb_case cells.
    NB_CASE = 32       # game.get_nb_case()
    NB_ACTIONS = 16    # game.get_nb_actions()
    BATCH = 200        # e.g. MCTS leaf evaluations batched together

    key = jax.random.PRNGKey(0)
    kx, kp = jax.random.split(key)

    xb = jax.random.uniform(kx, (BATCH, NB_CASE), jnp.float32, -1.0, 1.0)
    params = init_params(kp, NB_CASE, NB_ACTIONS)
    packed = pack_params(params, NB_CASE, NB_ACTIONS)

    # Batched path: 1 grid step (208 rows) on v5e/v6e; 2 balanced 104-row
    # tiles on v7x (one per TensorCore).  Weights are VMEM-resident.
    probs, value = fcnn_forward_batch(xb, packed, NB_CASE, NB_ACTIONS)
    probs = jax.block_until_ready(probs)
    value = jax.block_until_ready(value)

    ref_probs, ref_value = fcnn_reference_batch(xb, params)
    assert probs.shape == (BATCH, NB_ACTIONS)
    assert value.shape == (BATCH, 1)
    assert jnp.allclose(probs, ref_probs, atol=1e-3, rtol=1e-3)
    assert jnp.allclose(value, ref_value, atol=1e-4, rtol=1e-4)
    # exact softmax division -> rows sum to 1 within f32 rounding
    assert jnp.allclose(jnp.sum(probs, axis=-1), 1.0, atol=1e-4)

    # Single-state path (original torch forward semantics).
    x1 = xb[0]
    p1, v1 = fcnn_forward(x1, packed, NB_CASE, NB_ACTIONS)
    p1 = jax.block_until_ready(p1)
    assert p1.shape == (NB_ACTIONS,)
    assert v1.shape == (1,)
    assert jnp.allclose(p1, ref_probs[0], atol=1e-3, rtol=1e-3)
    assert jnp.allclose(v1, ref_value[0], atol=1e-4, rtol=1e-4)

    # TODO(synk): get_coup_value's argmax/board lookup stays on the host (not
    # part of the nn.Module forward).
    print("KERNEL_OK")
</pallas_src>

<mosaic_0001>
module attributes {stable_mosaic.version = 11 : i64} {
  func.func @kernel(%arg0: i32, %arg1: memref<200x32xf32, #tpu.memory_space<vmem>>, %arg2: memref<32x128xf32, #tpu.memory_space<vmem>>, %arg3: memref<1x128xf32, #tpu.memory_space<vmem>>, %arg4: memref<128x128xf32, #tpu.memory_space<vmem>>, %arg5: memref<1x128xf32, #tpu.memory_space<vmem>>, %arg6: memref<128x128xf32, #tpu.memory_space<vmem>>, %arg7: memref<1x128xf32, #tpu.memory_space<vmem>>, %arg8: memref<200x128xf32, #tpu.memory_space<vmem>>) attributes {dimension_semantics = [#tpu.dimension_semantics<parallel>], iteration_bounds = array<i64: 1>, scalar_prefetch = 0 : i64, scratch_operands = 0 : i64, tpu.core_type = #tpu.core_type<tc>, window_params = [{transform_indices = @transform_0, window_bounds = array<i64: 200, 32>}, {pipeline_mode = #tpu.pipeline_mode<synchronous>, transform_indices = @transform_1, window_bounds = array<i64: 32, 128>}, {pipeline_mode = #tpu.pipeline_mode<synchronous>, transform_indices = @transform_2, window_bounds = array<i64: 1, 128>}, {pipeline_mode = #tpu.pipeline_mode<synchronous>, transform_indices = @transform_3, window_bounds = array<i64: 128, 128>}, {pipeline_mode = #tpu.pipeline_mode<synchronous>, transform_indices = @transform_4, window_bounds = array<i64: 1, 128>}, {pipeline_mode = #tpu.pipeline_mode<synchronous>, transform_indices = @transform_5, window_bounds = array<i64: 128, 128>}, {pipeline_mode = #tpu.pipeline_mode<synchronous>, transform_indices = @transform_6, window_bounds = array<i64: 1, 128>}, {transform_indices = @transform_7, window_bounds = array<i64: 200, 128>}]} {
    %c0 = arith.constant 0 : index
    %c0_0 = arith.constant 0 : index
    %0 = vector.load %arg1[%c0, %c0_0] : memref<200x32xf32, #tpu.memory_space<vmem>>, vector<200x32xf32>
    %c0_1 = arith.constant 0 : index
    %c0_2 = arith.constant 0 : index
    %1 = vector.load %arg2[%c0_1, %c0_2] : memref<32x128xf32, #tpu.memory_space<vmem>>, vector<32x128xf32>
    %cst = arith.constant dense<0.000000e+00> : vector<200x128xf32>
    %2 = tpu.matmul %0, %1, %cst {dimension_numbers = #tpu.dot_dimension_numbers<[1], [0], [0], [1], [0, 0, 1, 1], [], []>} : vector<200x32xf32>, vector<32x128xf32>, vector<200x128xf32> -> vector<200x128xf32>
    %c0_3 = arith.constant 0 : index
    %c0_4 = arith.constant 0 : index
    %3 = vector.load %arg3[%c0_3, %c0_4] : memref<1x128xf32, #tpu.memory_space<vmem>>, vector<1x128xf32>
    %4 = vector.broadcast %3 : vector<1x128xf32> to vector<200x128xf32>
    %5 = arith.addf %2, %4 : vector<200x128xf32>
    %cst_5 = arith.constant 0.000000e+00 : f32
    %6 = vector.broadcast %cst_5 : f32 to vector<200x128xf32>
    %7 = arith.maximumf %5, %6 : vector<200x128xf32>
    %c0_6 = arith.constant 0 : index
    %c0_7 = arith.constant 0 : index
    %8 = vector.load %arg4[%c0_6, %c0_7] : memref<128x128xf32, #tpu.memory_space<vmem>>, vector<128x128xf32>
    %cst_8 = arith.constant dense<0.000000e+00> : vector<200x128xf32>
    %9 = tpu.matmul %7, %8, %cst_8 {dimension_numbers = #tpu.dot_dimension_numbers<[1], [0], [0], [1], [0, 0, 1, 1], [], []>} : vector<200x128xf32>, vector<128x128xf32>, vector<200x128xf32> -> vector<200x128xf32>
    %c0_9 = arith.constant 0 : index
    %c0_10 = arith.constant 0 : index
    %10 = vector.load %arg5[%c0_9, %c0_10] : memref<1x128xf32, #tpu.memory_space<vmem>>, vector<1x128xf32>
    %11 = vector.broadcast %10 : vector<1x128xf32> to vector<200x128xf32>
    %12 = arith.addf %9, %11 : vector<200x128xf32>
    %cst_11 = arith.constant 0.000000e+00 : f32
    %13 = vector.broadcast %cst_11 : f32 to vector<200x128xf32>
    %14 = arith.maximumf %12, %13 : vector<200x128xf32>
    %c0_12 = arith.constant 0 : index
    %c0_13 = arith.constant 0 : index
    %15 = vector.load %arg6[%c0_12, %c0_13] : memref<128x128xf32, #tpu.memory_space<vmem>>, vector<128x128xf32>
    %cst_14 = arith.constant dense<0.000000e+00> : vector<200x128xf32>
    %16 = tpu.matmul %14, %15, %cst_14 {dimension_numbers = #tpu.dot_dimension_numbers<[1], [0], [0], [1], [0, 0, 1, 1], [], []>} : vector<200x128xf32>, vector<128x128xf32>, vector<200x128xf32> -> vector<200x128xf32>
    %c0_15 = arith.constant 0 : index
    %c0_16 = arith.constant 0 : index
    %17 = vector.load %arg7[%c0_15, %c0_16] : memref<1x128xf32, #tpu.memory_space<vmem>>, vector<1x128xf32>
    %18 = vector.broadcast %17 : vector<1x128xf32> to vector<200x128xf32>
    %19 = arith.addf %16, %18 : vector<200x128xf32>
    %20 = tpu.iota {dimensions = array<i32: 1>} : vector<200x128xi32>
    %c16_i32 = arith.constant 16 : i32
    %21 = vector.broadcast %c16_i32 : i32 to vector<200x128xi32>
    %22 = arith.cmpi slt, %20, %21 : vector<200x128xi32>
    %cst_17 = arith.constant -1.000000e+30 : f32
    %23 = vector.broadcast %cst_17 : f32 to vector<200x128xf32>
    %24 = arith.select %22, %19, %23 : vector<200x128xi1>, vector<200x128xf32>
    %cst_18 = arith.constant dense<0xFF800000> : vector<200xf32>
    %25 = vector.multi_reduction <maximumf>, %24, %cst_18 [1] : vector<200x128xf32> to vector<200xf32>
    %26 = vector.shape_cast %25 : vector<200xf32> to vector<200x1xf32>
    %27 = vector.broadcast %26 : vector<200x1xf32> to vector<200x128xf32>
    %28 = arith.subf %24, %27 : vector<200x128xf32>
    %29 = math.exp %28 : vector<200x128xf32>
    %cst_19 = arith.constant dense<0.000000e+00> : vector<200xf32>
    %30 = vector.multi_reduction <add>, %29, %cst_19 [1] : vector<200x128xf32> to vector<200xf32>
    %31 = vector.shape_cast %30 : vector<200xf32> to vector<200x1xf32>
    %32 = vector.broadcast %31 : vector<200x1xf32> to vector<200x128xf32>
    %33 = arith.divf %29, %32 : vector<200x128xf32>
    %34 = vector.extract_strided_slice %19 {offsets = [0, 16], sizes = [200, 1], strides = [1, 1]} : vector<200x128xf32> to vector<200x1xf32>
    %35 = math.tanh %34 : vector<200x1xf32>
    %c16_i32_20 = arith.constant 16 : i32
    %36 = vector.broadcast %c16_i32_20 : i32 to vector<200x128xi32>
    %37 = arith.cmpi eq, %20, %36 : vector<200x128xi32>
    %38 = vector.shape_cast %35 : vector<200x1xf32> to vector<200x1xf32>
    %39 = vector.broadcast %38 : vector<200x1xf32> to vector<200x128xf32>
    %40 = arith.select %37, %39, %33 : vector<200x128xi1>, vector<200x128xf32>
    %c0_21 = arith.constant 0 : index
    %c0_22 = arith.constant 0 : index
    %41 = vector.load %arg8[%c0_21, %c0_22] : memref<200x128xf32, #tpu.memory_space<vmem>>, vector<200x128xf32>
    tpu.vector_store %arg8[%c0_21, %c0_22], %40 {strides = array<i32>} : memref<200x128xf32, #tpu.memory_space<vmem>>, vector<200x128xf32>,
    return
  }
  func.func @transform_0(%arg0: i32) -> (i32, i32) {
    %c0_i32 = arith.constant 0 : i32
    %c0_i32_0 = arith.constant 0 : i32
    return %arg0, %c0_i32 : i32, i32
  }
  func.func @transform_1(%arg0: i32) -> (i32, i32) {
    %c0_i32 = arith.constant 0 : i32
    %c0_i32_0 = arith.constant 0 : i32
    %c0_i32_1 = arith.constant 0 : i32
    return %c0_i32, %c0_i32_0 : i32, i32
  }
  func.func @transform_2(%arg0: i32) -> (i32, i32) {
    %c0_i32 = arith.constant 0 : i32
    %c0_i32_0 = arith.constant 0 : i32
    %c0_i32_1 = arith.constant 0 : i32
    return %c0_i32, %c0_i32_0 : i32, i32
  }
  func.func @transform_3(%arg0: i32) -> (i32, i32) {
    %c0_i32 = arith.constant 0 : i32
    %c0_i32_0 = arith.constant 0 : i32
    %c0_i32_1 = arith.constant 0 : i32
    return %c0_i32, %c0_i32_0 : i32, i32
  }
  func.func @transform_4(%arg0: i32) -> (i32, i32) {
    %c0_i32 = arith.constant 0 : i32
    %c0_i32_0 = arith.constant 0 : i32
    %c0_i32_1 = arith.constant 0 : i32
    return %c0_i32, %c0_i32_0 : i32, i32
  }
  func.func @transform_5(%arg0: i32) -> (i32, i32) {
    %c0_i32 = arith.constant 0 : i32
    %c0_i32_0 = arith.constant 0 : i32
    %c0_i32_1 = arith.constant 0 : i32
    return %c0_i32, %c0_i32_0 : i32, i32
  }
  func.func @transform_6(%arg0: i32) -> (i32, i32) {
    %c0_i32 = arith.constant 0 : i32
    %c0_i32_0 = arith.constant 0 : i32
    %c0_i32_1 = arith.constant 0 : i32
    return %c0_i32, %c0_i32_0 : i32, i32
  }
  func.func @transform_7(%arg0: i32) -> (i32, i32) {
    %c0_i32 = arith.constant 0 : i32
    %c0_i32_0 = arith.constant 0 : i32
    return %arg0, %c0_i32 : i32, i32
  }
}

</mosaic_0001>

<llo_original>
// kernel: tpu_custom_call.1
$region0: #{tpu_custom_call.1}
  #allocation0 [shape = 'u32[]', space=smem, size = 0x4, offset = 0x4, fixed_abs, tag = 'smem constant byte address 0x4 - core index']
  #allocation1 [shape = 'u32[72,128]{1,0:T(1,128)}', space=vmem, size = 0x9000, scoped, tag = 'internal scratch']
  %s0 = inlined_call_operand.vmem [shape: f32[200,32], index: 0, kind: input, shape index: {}]
  %s1 = inlined_call_operand.hbm [shape: f32[32,128], index: 1, kind: input, shape index: {}]
  %s2 = inlined_call_operand.vmem [shape: f32[1,128], index: 2, kind: input, shape index: {}]
  %s3 = inlined_call_operand.vmem [shape: f32[128,128], index: 3, kind: input, shape index: {}]
  %s4 = inlined_call_operand.vmem [shape: f32[1,128], index: 4, kind: input, shape index: {}]
  %s5 = inlined_call_operand.vmem [shape: f32[128,128], index: 5, kind: input, shape index: {}]
  %s6 = inlined_call_operand.vmem [shape: f32[1,128], index: 6, kind: input, shape index: {}]
  %s7 = inlined_call_operand.hbm [shape: f32[200,128], index: 7, kind: output, shape index: {}]
  %s8 = sld [smem:[#allocation0]]
  $region42: #{tpu_custom_call.1} parent=0
    _
  %s10 = ssub.s32 1, %s8
  %s11 = scalar_select 0, %s10, %s8
  $region1: #{tpu_custom_call.1} parent=0
    #allocation2 [shape = 'u8[16384]{0}', space=vmem, size = 0x4000, scoped, tag = 'input window, operand 1, single buffered']
    #allocation3 [shape = 's32[1]{0}', space=sflag, size = 0x4, scoped, tag = 'scoped memory for tpu_custom_call.1']
    #allocation4 [shape = 's32[1]{0}', space=sflag, size = 0x4, scoped, tag = 'scoped memory for tpu_custom_call.1']
    #allocation5 [shape = 'u8[102400]{0}', space=vmem, size = 0x19000, scoped, tag = 'output window, operand 0, single buffered']
    %12 = vsyncpa [#allocation3], 0
    %13 = vsyncpa [#allocation4], 0
    // Predicated region
    $region2: #{tpu_custom_call.1} parent=1 // pred_check
      _
    $region3: #{tpu_custom_call.1} parent=1 // pred_check_branch
      %15 = sbr.rel (0) target = $region5
    $region4: #{tpu_custom_call.1} parent=1 // pred_region
      _
    $region5: #{tpu_custom_call.1} parent=1 // pred_fallthru
      _
    // Predicated region
    $region6: #{tpu_custom_call.1} parent=1 // pred_check
      _
    $region7: #{tpu_custom_call.1} parent=1 // pred_check_branch
      %17 = sbr.rel (0) target = $region9
    $region8: #{tpu_custom_call.1} parent=1 // pred_region
      %19 = vsyncadd [#allocation3], 0
      %s20 = sshll.u32 %s1, 4
      %s21 = int_to_ptr.hbm [resolvable:$true] %s20
      %s22 = sshll.u32 [#allocation2], 4
      %s23 = int_to_ptr.vmem [resolvable:$true] %s22
      %28 = dma.hbm_to_vmem [thread:$0]  %s21, 512, %s23, [#allocation3], 128, 128, 8
    $region9: #{tpu_custom_call.1} parent=1 // pred_fallthru
      _
    // Predicated region
    $region10: #{tpu_custom_call.1} parent=1 // pred_check
      _
    $region11: #{tpu_custom_call.1} parent=1 // pred_check_branch
      %30 = sbr.rel (0) target = $region13
    $region12: #{tpu_custom_call.1} parent=1 // pred_region
      _
    $region13: #{tpu_custom_call.1} parent=1 // pred_fallthru
      _
    // Predicated region
    $region14: #{tpu_custom_call.1} parent=1 // pred_check
      _
    $region15: #{tpu_custom_call.1} parent=1 // pred_check_branch
      %32 = sbr.rel (0) target = $region17
    $region16: #{tpu_custom_call.1} parent=1 // pred_region
      _
    $region17: #{tpu_custom_call.1} parent=1 // pred_fallthru
      _
    // Predicated region
    $region18: #{tpu_custom_call.1} parent=1 // pred_check
      _
    $region19: #{tpu_custom_call.1} parent=1 // pred_check_branch
      %34 = sbr.rel (0) target = $region21
    $region20: #{tpu_custom_call.1} parent=1 // pred_region
      _
    $region21: #{tpu_custom_call.1} parent=1 // pred_fallthru
      _
    // Predicated region
    $region22: #{tpu_custom_call.1} parent=1 // pred_check
      _
    $region23: #{tpu_custom_call.1} parent=1 // pred_check_branch
      %36 = sbr.rel (0) target = $region25
    $region24: #{tpu_custom_call.1} parent=1 // pred_region
      _
    $region25: #{tpu_custom_call.1} parent=1 // pred_fallthru
      _
    // Predicated region
    $region26: #{tpu_custom_call.1} parent=1 // pred_check
      _
    $region27: #{tpu_custom_call.1} parent=1 // pred_check_branch
      %38 = sbr.rel (0) target = $region29
    $region28: #{tpu_custom_call.1} parent=1 // pred_region
      _
    $region29: #{tpu_custom_call.1} parent=1 // pred_fallthru
      _
    // Predicated region
    $region30: #{tpu_custom_call.1} parent=1 // pred_check
      _
    $region31: #{tpu_custom_call.1} parent=1 // pred_check_branch
      %40 = sbr.rel (0) target = $region33
    $region32: #{tpu_custom_call.1} parent=1 // pred_region
      %42 = dma.done [#allocation3], 512
    $region33: #{tpu_custom_call.1} parent=1 // pred_fallthru
      _
    %v43 = vld [vmem:[%s0] sm:$0xff]
    %v44 = vld [vmem:[%s0 + $0x8] sm:$0xff]
    %v45 = vld [vmem:[%s0 + $0x10] sm:$0xff]
    %v46 = vld [vmem:[%s0 + $0x18] sm:$0xff]
    %v47 = vld [vmem:[%s0 + $0x20] sm:$0xff]
    %v48 = vld [vmem:[%s0 + $0x28] sm:$0xff]
    %v49 = vld [vmem:[%s0 + $0x30] sm:$0xff]
    %v50 = vld [vmem:[%s0 + $0x38] sm:$0xff]
    %v51 = vld [vmem:[%s0 + $0x40] sm:$0xff]
    %v52 = vld [vmem:[%s0 + $0x48] sm:$0xff]
    %v53 = vld [vmem:[%s0 + $0x50] sm:$0xff]
    %v54 = vld [vmem:[%s0 + $0x58] sm:$0xff]
    %v55 = vld [vmem:[%s0 + $0x60] sm:$0xff]
    %v56 = vld [vmem:[%s0 + $0x68] sm:$0xff]
    %v57 = vld [vmem:[%s0 + $0x70] sm:$0xff]
    %v58 = vld [vmem:[%s0 + $0x78] sm:$0xff]
    %v59 = vld [vmem:[%s0 + $0x80] sm:$0xff]
    %v60 = vld [vmem:[%s0 + $0x88] sm:$0xff]
    %v61 = vld [vmem:[%s0 + $0x90] sm:$0xff]
    %v62 = vld [vmem:[%s0 + $0x98] sm:$0xff]
    %v63 = vld [vmem:[%s0 + $0xa0] sm:$0xff]
    %v64 = vld [vmem:[%s0 + $0xa8] sm:$0xff]
    %v65 = vld [vmem:[%s0 + $0xb0] sm:$0xff]
    %v66 = vld [vmem:[%s0 + $0xb8] sm:$0xff]
    %v67 = vld [vmem:[%s0 + $0xc0] sm:$0xff]
    %v68 = vld [vmem:[#allocation2] sm:$0xff]
    %v69 = vld [vmem:[#allocation2 + $0x8] sm:$0xff]
    %v70 = vld [vmem:[#allocation2 + $0x10] sm:$0xff]
    %v71 = vld [vmem:[#allocation2 + $0x18] sm:$0xff]
    %v72 = vld [vmem:[%s2] sm:$0x1]
    %v74 = vperm.slane %v72, 0
    %vm76 = vcmask 261120
    %v78 = vsel %vm76, %v43, 0
    %v81 = vsel %vm76, %v44, 0
    %v84 = vsel %vm76, %v45, 0
    %v87 = vsel %vm76, %v46, 0
    %v90 = vsel %vm76, %v47, 0
    %v93 = vsel %vm76, %v48, 0
    %v96 = vsel %vm76, %v49, 0
    %v99 = vsel %vm76, %v50, 0
    %v102 = vsel %vm76, %v51, 0
    %v105 = vsel %vm76, %v52, 0
    %v108 = vsel %vm76, %v53, 0
    %v111 = vsel %vm76, %v54, 0
    %v114 = vsel %vm76, %v55, 0
    %v117 = vsel %vm76, %v56, 0
    %v120 = vsel %vm76, %v57, 0
    %v123 = vsel %vm76, %v58, 0
    %v126 = vsel %vm76, %v59, 0
    %v129 = vsel %vm76, %v60, 0
    %v132 = vsel %vm76, %v61, 0
    %v135 = vsel %vm76, %v62, 0
    %v138 = vsel %vm76, %v63, 0
    %v141 = vsel %vm76, %v64, 0
    %v144 = vsel %vm76, %v65, 0
    %v147 = vsel %vm76, %v66, 0
    %v150 = vsel %vm76, %v67, 0
    %152 = vmatpush.msra.mxu0 0.0
    %153 = vmatpush.msra.mxu0 0.0
    %154 = vmatpush.msra.mxu0 0.0
    %155 = vmatpush.msra.mxu0 0.0
    %156 = vmatpush.msra.mxu0 0.0
    %157 = vmatpush.msra.mxu0 0.0
    %158 = vmatpush.msra.mxu0 0.0
    %159 = vmatpush.msra.mxu0 0.0
    %160 = vmatpush.msra.mxu0 0.0
    %161 = vmatpush.msra.mxu0 0.0
    %162 = vmatpush.msra.mxu0 0.0
    %163 = vmatpush.msra.mxu0 0.0
    %164 = vmatpush.msra.mxu0 %v71
    %165 = vmatpush.msra.mxu0 %v70
    %166 = vmatpush.msra.mxu0 %v69
    %167 = vmatpush.msra.mxu0 %v68
    %168 = vmatmul.f32.gmra.mxu0 %v78
    %v169 = vpop.f32.mrf.mxu0
    %v170 = vadd.f32 %v74, %v169
    %171 = vmatmul.f32.gmra.mxu0 %v81
    %v172 = vpop.f32.mrf.mxu0
    %v173 = vadd.f32 %v74, %v172
    %174 = vmatmul.f32.gmra.mxu0 %v84
    %v175 = vpop.f32.mrf.mxu0
    %v176 = vadd.f32 %v74, %v175
    %177 = vmatmul.f32.gmra.mxu0 %v87
    %v178 = vpop.f32.mrf.mxu0
    %v179 = vadd.f32 %v74, %v178
    %180 = vmatmul.f32.gmra.mxu0 %v90
    %v181 = vpop.f32.mrf.mxu0
    %v182 = vadd.f32 %v74, %v181
    %183 = vmatmul.f32.gmra.mxu0 %v93
    %v184 = vpop.f32.mrf.mxu0
    %v185 = vadd.f32 %v74, %v184
    %186 = vmatmul.f32.gmra.mxu0 %v96
    %v187 = vpop.f32.mrf.mxu0
    %v188 = vadd.f32 %v74, %v187
    %189 = vmatmul.f32.gmra.mxu0 %v99
    %v190 = vpop.f32.mrf.mxu0
    %v191 = vadd.f32 %v74, %v190
    %192 = vmatmul.f32.gmra.mxu0 %v102
    %v193 = vpop.f32.mrf.mxu0
    %v194 = vadd.f32 %v74, %v193
    %195 = vmatmul.f32.gmra.mxu0 %v105
    %v196 = vpop.f32.mrf.mxu0
    %v197 = vadd.f32 %v74, %v196
    %198 = vmatmul.f32.gmra.mxu0 %v108
    %v199 = vpop.f32.mrf.mxu0
    %v200 = vadd.f32 %v74, %v199
    %201 = vmatmul.f32.gmra.mxu0 %v111
    %v202 = vpop.f32.mrf.mxu0
    %v203 = vadd.f32 %v74, %v202
    %204 = vmatmul.f32.gmra.mxu0 %v114
    %v205 = vpop.f32.mrf.mxu0
    %v206 = vadd.f32 %v74, %v205
    %207 = vmatmul.f32.gmra.mxu0 %v117
    %v208 = vpop.f32.mrf.mxu0
    %v209 = vadd.f32 %v74, %v208
    %210 = vmatmul.f32.gmra.mxu0 %v120
    %v211 = vpop.f32.mrf.mxu0
    %v212 = vadd.f32 %v74, %v211
    %213 = vmatmul.f32.gmra.mxu0 %v123
    %v214 = vpop.f32.mrf.mxu0
    %v215 = vadd.f32 %v74, %v214
    %216 = vmatmul.f32.gmra.mxu0 %v126
    %v217 = vpop.f32.mrf.mxu0
    %v218 = vadd.f32 %v74, %v217
    %219 = vmatmul.f32.gmra.mxu0 %v129
    %v220 = vpop.f32.mrf.mxu0
    %v221 = vadd.f32 %v74, %v220
    %222 = vmatmul.f32.gmra.mxu0 %v132
    %v223 = vpop.f32.mrf.mxu0
    %v224 = vadd.f32 %v74, %v223
    %225 = vmatmul.f32.gmra.mxu0 %v135
    %v226 = vpop.f32.mrf.mxu0
    %v227 = vadd.f32 %v74, %v226
    %228 = vmatmul.f32.gmra.mxu0 %v138
    %v229 = vpop.f32.mrf.mxu0
    %v230 = vadd.f32 %v74, %v229
    %231 = vmatmul.f32.gmra.mxu0 %v141
    %v232 = vpop.f32.mrf.mxu0
    %v233 = vadd.f32 %v74, %v232
    %234 = vmatmul.f32.gmra.mxu0 %v144
    %v235 = vpop.f32.mrf.mxu0
    %v236 = vadd.f32 %v74, %v235
    %237 = vmatmul.f32.gmra.mxu0 %v147
    %v238 = vpop.f32.mrf.mxu0
    %v239 = vadd.f32 %v74, %v238
    %240 = vmatmul.f32.gmra.mxu0 %v150
    %v241 = vpop.f32.mrf.mxu0
    %v242 = vadd.f32 %v74, %v241
    %243 = vdwg.mxu0
    %v244 = vmax.f32 %v170, 0.0
    %v245 = vmax.f32 %v173, 0.0
    %v246 = vmax.f32 %v176, 0.0
    %v247 = vmax.f32 %v179, 0.0
    %v248 = vmax.f32 %v182, 0.0
    %v249 = vmax.f32 %v185, 0.0
    %v250 = vmax.f32 %v188, 0.0
    %v251 = vmax.f32 %v191, 0.0
    %v252 = vmax.f32 %v194, 0.0
    %v253 = vmax.f32 %v197, 0.0
    %v254 = vmax.f32 %v200, 0.0
    %v255 = vmax.f32 %v203, 0.0
    %v256 = vmax.f32 %v206, 0.0
    %v257 = vmax.f32 %v209, 0.0
    %v258 = vmax.f32 %v212, 0.0
    %v259 = vmax.f32 %v215, 0.0
    %v260 = vmax.f32 %v218, 0.0
    %v261 = vmax.f32 %v221, 0.0
    %v262 = vmax.f32 %v224, 0.0
    %v263 = vmax.f32 %v227, 0.0
    %v264 = vmax.f32 %v230, 0.0
    %v265 = vmax.f32 %v233, 0.0
    %v266 = vmax.f32 %v236, 0.0
    %v267 = vmax.f32 %v239, 0.0
    %v268 = vmax.f32 %v242, 0.0
    %v269 = vld [vmem:[%s3] sm:$0xff]
    %v270 = vld [vmem:[%s3 + $0x8] sm:$0xff]
    %v271 = vld [vmem:[%s3 + $0x10] sm:$0xff]
    %v272 = vld [vmem:[%s3 + $0x18] sm:$0xff]
    %v273 = vld [vmem:[%s3 + $0x20] sm:$0xff]
    %v274 = vld [vmem:[%s3 + $0x28] sm:$0xff]
    %v275 = vld [vmem:[%s3 + $0x30] sm:$0xff]
    %v276 = vld [vmem:[%s3 + $0x38] sm:$0xff]
    %v277 = vld [vmem:[%s3 + $0x40] sm:$0xff]
    %v278 = vld [vmem:[%s3 + $0x48] sm:$0xff]
    %v279 = vld [vmem:[%s3 + $0x50] sm:$0xff]
    %v280 = vld [vmem:[%s3 + $0x58] sm:$0xff]
    %v281 = vld [vmem:[%s3 + $0x60] sm:$0xff]
    %v282 = vld [vmem:[%s3 + $0x68] sm:$0xff]
    %v283 = vld [vmem:[%s3 + $0x70] sm:$0xff]
    %v284 = vld [vmem:[%s3 + $0x78] sm:$0xff]
    %v285 = vld [vmem:[%s4] sm:$0x1]
    %v287 = vperm.slane %v285, 0
    %289 = vmatpush.msra.mxu0 %v284
    %290 = vmatpush.msra.mxu0 %v283
    %291 = vmatpush.msra.mxu0 %v282
    %292 = vmatpush.msra.mxu0 %v281
    %293 = vmatpush.msra.mxu0 %v280
    %294 = vmatpush.msra.mxu0 %v279
    %295 = vmatpush.msra.mxu0 %v278
    %296 = vmatpush.msra.mxu0 %v277
    %297 = vmatpush.msra.mxu0 %v276
    %298 = vmatpush.msra.mxu0 %v275
    %299 = vmatpush.msra.mxu0 %v274
    %300 = vmatpush.msra.mxu0 %v273
    %301 = vmatpush.msra.mxu0 %v272
    %302 = vmatpush.msra.mxu0 %v271
    %303 = vmatpush.msra.mxu0 %v270
    %304 = vmatpush.msra.mxu0 %v269
    %305 = vmatmul.f32.gmra.mxu0 %v244
    %v306 = vpop.f32.mrf.mxu0
    %v307 = vadd.f32 %v287, %v306
    %308 = vmatmul.f32.gmra.mxu0 %v245
    %v309 = vpop.f32.mrf.mxu0
    %v310 = vadd.f32 %v287, %v309
    %311 = vmatmul.f32.gmra.mxu0 %v246
    %v312 = vpop.f32.mrf.mxu0
    %v313 = vadd.f32 %v287, %v312
    %314 = vmatmul.f32.gmra.mxu0 %v247
    %v315 = vpop.f32.mrf.mxu0
    %v316 = vadd.f32 %v287, %v315
    %317 = vmatmul.f32.gmra.mxu0 %v248
    %v318 = vpop.f32.mrf.mxu0
    %v319 = vadd.f32 %v287, %v318
    %320 = vmatmul.f32.gmra.mxu0 %v249
    %v321 = vpop.f32.mrf.mxu0
    %v322 = vadd.f32 %v287, %v321
    %323 = vmatmul.f32.gmra.mxu0 %v250
    %v324 = vpop.f32.mrf.mxu0
    %v325 = vadd.f32 %v287, %v324
    %326 = vmatmul.f32.gmra.mxu0 %v251
    %v327 = vpop.f32.mrf.mxu0
    %v328 = vadd.f32 %v287, %v327
    %329 = vmatmul.f32.gmra.mxu0 %v252
    %v330 = vpop.f32.mrf.mxu0
    %v331 = vadd.f32 %v287, %v330
    %332 = vmatmul.f32.gmra.mxu0 %v253
    %v333 = vpop.f32.mrf.mxu0
    %v334 = vadd.f32 %v287, %v333
    %335 = vmatmul.f32.gmra.mxu0 %v254
    %v336 = vpop.f32.mrf.mxu0
    %v337 = vadd.f32 %v287, %v336
    %338 = vmatmul.f32.gmra.mxu0 %v255
    %v339 = vpop.f32.mrf.mxu0
    %v340 = vadd.f32 %v287, %v339
    %341 = vmatmul.f32.gmra.mxu0 %v256
    %v342 = vpop.f32.mrf.mxu0
    %v343 = vadd.f32 %v287, %v342
    %344 = vmatmul.f32.gmra.mxu0 %v257
    %v345 = vpop.f32.mrf.mxu0
    %v346 = vadd.f32 %v287, %v345
    %347 = vmatmul.f32.gmra.mxu0 %v258
    %v348 = vpop.f32.mrf.mxu0
    %v349 = vadd.f32 %v287, %v348
    %350 = vmatmul.f32.gmra.mxu0 %v259
    %v351 = vpop.f32.mrf.mxu0
    %v352 = vadd.f32 %v287, %v351
    %353 = vmatmul.f32.gmra.mxu0 %v260
    %v354 = vpop.f32.mrf.mxu0
    %v355 = vadd.f32 %v287, %v354
    %356 = vmatmul.f32.gmra.mxu0 %v261
    %v357 = vpop.f32.mrf.mxu0
    %v358 = vadd.f32 %v287, %v357
    %359 = vmatmul.f32.gmra.mxu0 %v262
    %v360 = vpop.f32.mrf.mxu0
    %v361 = vadd.f32 %v287, %v360
    %362 = vmatmul.f32.gmra.mxu0 %v263
    %v363 = vpop.f32.mrf.mxu0
    %v364 = vadd.f32 %v287, %v363
    %365 = vmatmul.f32.gmra.mxu0 %v264
    %v366 = vpop.f32.mrf.mxu0
    %v367 = vadd.f32 %v287, %v366
    %368 = vmatmul.f32.gmra.mxu0 %v265
    %v369 = vpop.f32.mrf.mxu0
    %v370 = vadd.f32 %v287, %v369
    %371 = vmatmul.f32.gmra.mxu0 %v266
    %v372 = vpop.f32.mrf.mxu0
    %v373 = vadd.f32 %v287, %v372
    %374 = vmatmul.f32.gmra.mxu0 %v267
    %v375 = vpop.f32.mrf.mxu0
    %v376 = vadd.f32 %v287, %v375
    %377 = vmatmul.f32.gmra.mxu0 %v268
    %v378 = vpop.f32.mrf.mxu0
    %v379 = vadd.f32 %v287, %v378
    %380 = vdwg.mxu0
    %v381 = vmax.f32 %v307, 0.0
    %v382 = vmax.f32 %v310, 0.0
    %v383 = vmax.f32 %v313, 0.0
    %v384 = vmax.f32 %v316, 0.0
    %v385 = vmax.f32 %v319, 0.0
    %v386 = vmax.f32 %v322, 0.0
    %v387 = vmax.f32 %v325, 0.0
    %v388 = vmax.f32 %v328, 0.0
    %v389 = vmax.f32 %v331, 0.0
    %v390 = vmax.f32 %v334, 0.0
    %v391 = vmax.f32 %v337, 0.0
    %v392 = vmax.f32 %v340, 0.0
    %v393 = vmax.f32 %v343, 0.0
    %v394 = vmax.f32 %v346, 0.0
    %v395 = vmax.f32 %v349, 0.0
    %v396 = vmax.f32 %v352, 0.0
    %v397 = vmax.f32 %v355, 0.0
    %v398 = vmax.f32 %v358, 0.0
    %v399 = vmax.f32 %v361, 0.0
    %v400 = vmax.f32 %v364, 0.0
    %v401 = vmax.f32 %v367, 0.0
    %v402 = vmax.f32 %v370, 0.0
    %v403 = vmax.f32 %v373, 0.0
    %v404 = vmax.f32 %v376, 0.0
    %v405 = vmax.f32 %v379, 0.0
    %v406 = vld [vmem:[%s5] sm:$0xff]
    %v407 = vld [vmem:[%s5 + $0x8] sm:$0xff]
    %v408 = vld [vmem:[%s5 + $0x10] sm:$0xff]
    %v409 = vld [vmem:[%s5 + $0x18] sm:$0xff]
    %v410 = vld [vmem:[%s5 + $0x20] sm:$0xff]
    %v411 = vld [vmem:[%s5 + $0x28] sm:$0xff]
    %v412 = vld [vmem:[%s5 + $0x30] sm:$0xff]
    %v413 = vld [vmem:[%s5 + $0x38] sm:$0xff]
    %v414 = vld [vmem:[%s5 + $0x40] sm:$0xff]
    %v415 = vld [vmem:[%s5 + $0x48] sm:$0xff]
    %v416 = vld [vmem:[%s5 + $0x50] sm:$0xff]
    %v417 = vld [vmem:[%s5 + $0x58] sm:$0xff]
    %v418 = vld [vmem:[%s5 + $0x60] sm:$0xff]
    %v419 = vld [vmem:[%s5 + $0x68] sm:$0xff]
    %v420 = vld [vmem:[%s5 + $0x70] sm:$0xff]
    %v421 = vld [vmem:[%s5 + $0x78] sm:$0xff]
    %v422 = vld [vmem:[%s6] sm:$0x1]
    %v424 = vperm.slane %v422, 0
    %426 = vmatpush.msra.mxu0 %v421
    %427 = vmatpush.msra.mxu0 %v420
    %428 = vmatpush.msra.mxu0 %v419
    %429 = vmatpush.msra.mxu0 %v418
    %430 = vmatpush.msra.mxu0 %v417
    %431 = vmatpush.msra.mxu0 %v416
    %432 = vmatpush.msra.mxu0 %v415
    %433 = vmatpush.msra.mxu0 %v414
    %434 = vmatpush.msra.mxu0 %v413
    %435 = vmatpush.msra.mxu0 %v412
    %436 = vmatpush.msra.mxu0 %v411
    %437 = vmatpush.msra.mxu0 %v410
    %438 = vmatpush.msra.mxu0 %v409
    %439 = vmatpush.msra.mxu0 %v408
    %440 = vmatpush.msra.mxu0 %v407
    %441 = vmatpush.msra.mxu0 %v406
    %442 = vmatmul.f32.gmra.mxu0 %v381
    %v443 = vpop.f32.mrf.mxu0
    %v444 = vadd.f32 %v424, %v443
    %445 = vmatmul.f32.gmra.mxu0 %v382
    %v446 = vpop.f32.mrf.mxu0
    %v447 = vadd.f32 %v424, %v446
    %448 = vmatmul.f32.gmra.mxu0 %v383
    %v449 = vpop.f32.mrf.mxu0
    %v450 = vadd.f32 %v424, %v449
    %451 = vmatmul.f32.gmra.mxu0 %v384
    %v452 = vpop.f32.mrf.mxu0
    %v453 = vadd.f32 %v424, %v452
    %454 = vmatmul.f32.gmra.mxu0 %v385
    %v455 = vpop.f32.mrf.mxu0
    %v456 = vadd.f32 %v424, %v455
    %457 = vmatmul.f32.gmra.mxu0 %v386
    %v458 = vpop.f32.mrf.mxu0
    %v459 = vadd.f32 %v424, %v458
    %460 = vmatmul.f32.gmra.mxu0 %v387
    %v461 = vpop.f32.mrf.mxu0
    %v462 = vadd.f32 %v424, %v461
    %463 = vmatmul.f32.gmra.mxu0 %v388
    %v464 = vpop.f32.mrf.mxu0
    %v465 = vadd.f32 %v424, %v464
    %466 = vmatmul.f32.gmra.mxu0 %v389
    %v467 = vpop.f32.mrf.mxu0
    %v468 = vadd.f32 %v424, %v467
    %469 = vmatmul.f32.gmra.mxu0 %v390
    %v470 = vpop.f32.mrf.mxu0
    %v471 = vadd.f32 %v424, %v470
    %472 = vmatmul.f32.gmra.mxu0 %v391
    %v473 = vpop.f32.mrf.mxu0
    %v474 = vadd.f32 %v424, %v473
    %475 = vmatmul.f32.gmra.mxu0 %v392
    %v476 = vpop.f32.mrf.mxu0
    %v477 = vadd.f32 %v424, %v476
    %478 = vmatmul.f32.gmra.mxu0 %v393
    %v479 = vpop.f32.mrf.mxu0
    %v480 = vadd.f32 %v424, %v479
    %481 = vmatmul.f32.gmra.mxu0 %v394
    %v482 = vpop.f32.mrf.mxu0
    %v483 = vadd.f32 %v424, %v482
    %484 = vmatmul.f32.gmra.mxu0 %v395
    %v485 = vpop.f32.mrf.mxu0
    %v486 = vadd.f32 %v424, %v485
    %487 = vmatmul.f32.gmra.mxu0 %v396
    %v488 = vpop.f32.mrf.mxu0
    %v489 = vadd.f32 %v424, %v488
    %490 = vmatmul.f32.gmra.mxu0 %v397
    %v491 = vpop.f32.mrf.mxu0
    %v492 = vadd.f32 %v424, %v491
    %493 = vmatmul.f32.gmra.mxu0 %v398
    %v494 = vpop.f32.mrf.mxu0
    %v495 = vadd.f32 %v424, %v494
    %496 = vmatmul.f32.gmra.mxu0 %v399
    %v497 = vpop.f32.mrf.mxu0
    %v498 = vadd.f32 %v424, %v497
    %499 = vmatmul.f32.gmra.mxu0 %v400
    %v500 = vpop.f32.mrf.mxu0
    %v501 = vadd.f32 %v424, %v500
    %502 = vmatmul.f32.gmra.mxu0 %v401
    %v503 = vpop.f32.mrf.mxu0
    %v504 = vadd.f32 %v424, %v503
    %505 = vmatmul.f32.gmra.mxu0 %v402
    %v506 = vpop.f32.mrf.mxu0
    %v507 = vadd.f32 %v424, %v506
    %508 = vmatmul.f32.gmra.mxu0 %v403
    %v509 = vpop.f32.mrf.mxu0
    %v510 = vadd.f32 %v424, %v509
    %511 = vmatmul.f32.gmra.mxu0 %v404
    %v512 = vpop.f32.mrf.mxu0
    %v513 = vadd.f32 %v424, %v512
    %514 = vmatmul.f32.gmra.mxu0 %v405
    %v515 = vpop.f32.mrf.mxu0
    %v516 = vadd.f32 %v424, %v515
    %517 = vdwg.mxu0
    %v518 = vlaneseq
    %v519 = vand.u32 %v518, 127
    %vm520 = vcmp.lt.s32.totalorder %v519, 16
    %v521 = vsel %vm520, %v444, -1e+30
    %v522 = vsel %vm520, %v447, -1e+30
    %v523 = vsel %vm520, %v450, -1e+30
    %v524 = vsel %vm520, %v453, -1e+30
    %v525 = vsel %vm520, %v456, -1e+30
    %v526 = vsel %vm520, %v459, -1e+30
    %v527 = vsel %vm520, %v462, -1e+30
    %v528 = vsel %vm520, %v465, -1e+30
    %v529 = vsel %vm520, %v468, -1e+30
    %v530 = vsel %vm520, %v471, -1e+30
    %v531 = vsel %vm520, %v474, -1e+30
    %v532 = vsel %vm520, %v477, -1e+30
    %v533 = vsel %vm520, %v480, -1e+30
    %v534 = vsel %vm520, %v483, -1e+30
    %v535 = vsel %vm520, %v486, -1e+30
    %v536 = vsel %vm520, %v489, -1e+30
    %v537 = vsel %vm520, %v492, -1e+30
    %v538 = vsel %vm520, %v495, -1e+30
    %v539 = vsel %vm520, %v498, -1e+30
    %v540 = vsel %vm520, %v501, -1e+30
    %v541 = vsel %vm520, %v504, -1e+30
    %v542 = vsel %vm520, %v507, -1e+30
    %v543 = vsel %vm520, %v510, -1e+30
    %v544 = vsel %vm520, %v513, -1e+30
    %v545 = vsel %vm520, %v516, -1e+30
    %546 = vmax.xlane.f32.xlu0 %v521
    %v547 = vpop.xlane.xlu0 %546
    %548 = vmax.xlane.f32.xlu0 %v522
    %v549 = vpop.xlane.xlu0 %548
    %550 = vmax.xlane.f32.xlu0 %v523
    %v551 = vpop.xlane.xlu0 %550
    %552 = vmax.xlane.f32.xlu0 %v524
    %v553 = vpop.xlane.xlu0 %552
    %554 = vmax.xlane.f32.xlu0 %v525
    %v555 = vpop.xlane.xlu0 %554
    %556 = vmax.xlane.f32.xlu0 %v526
    %v557 = vpop.xlane.xlu0 %556
    %558 = vmax.xlane.f32.xlu0 %v527
    %v559 = vpop.xlane.xlu0 %558
    %560 = vmax.xlane.f32.xlu0 %v528
    %v561 = vpop.xlane.xlu0 %560
    %562 = vmax.xlane.f32.xlu0 %v529
    %v563 = vpop.xlane.xlu0 %562
    %564 = vmax.xlane.f32.xlu0 %v530
    %v565 = vpop.xlane.xlu0 %564
    %566 = vmax.xlane.f32.xlu0 %v531
    %v567 = vpop.xlane.xlu0 %566
    %568 = vmax.xlane.f32.xlu0 %v532
    %v569 = vpop.xlane.xlu0 %568
    %570 = vmax.xlane.f32.xlu0 %v533
    %v571 = vpop.xlane.xlu0 %570
    %572 = vmax.xlane.f32.xlu0 %v534
    %v573 = vpop.xlane.xlu0 %572
    %574 = vmax.xlane.f32.xlu0 %v535
    %v575 = vpop.xlane.xlu0 %574
    %576 = vmax.xlane.f32.xlu0 %v536
    %v577 = vpop.xlane.xlu0 %576
    %578 = vmax.xlane.f32.xlu0 %v537
    %v579 = vpop.xlane.xlu0 %578
    %580 = vmax.xlane.f32.xlu0 %v538
    %v581 = vpop.xlane.xlu0 %580
    %582 = vmax.xlane.f32.xlu0 %v539
    %v583 = vpop.xlane.xlu0 %582
    %584 = vmax.xlane.f32.xlu0 %v540
    %v585 = vpop.xlane.xlu0 %584
    %586 = vmax.xlane.f32.xlu0 %v541
    %v587 = vpop.xlane.xlu0 %586
    %588 = vmax.xlane.f32.xlu0 %v542
    %v589 = vpop.xlane.xlu0 %588
    %590 = vmax.xlane.f32.xlu0 %v543
    %v591 = vpop.xlane.xlu0 %590
    %592 = vmax.xlane.f32.xlu0 %v544
    %v593 = vpop.xlane.xlu0 %592
    %594 = vmax.xlane.f32.xlu0 %v545
    %v595 = vpop.xlane.xlu0 %594
    %v596 = vsub.f32 %v521, %v547
    %v597 = vsub.f32 %v522, %v549
    %v598 = vsub.f32 %v523, %v551
    %v599 = vsub.f32 %v524, %v553
    %v600 = vsub.f32 %v525, %v555
    %v601 = vsub.f32 %v526, %v557
    %v602 = vsub.f32 %v527, %v559
    %v603 = vsub.f32 %v528, %v561
    %v604 = vsub.f32 %v529, %v563
    %v605 = vsub.f32 %v530, %v565
    %v606 = vsub.f32 %v531, %v567
    %v607 = vsub.f32 %v532, %v569
    %v608 = vsub.f32 %v533, %v571
    %v609 = vsub.f32 %v534, %v573
    %v610 = vsub.f32 %v535, %v575
    %v611 = vsub.f32 %v536, %v577
    %v612 = vsub.f32 %v537, %v579
    %v613 = vsub.f32 %v538, %v581
    %v614 = vsub.f32 %v539, %v583
    %v615 = vsub.f32 %v540, %v585
    %v616 = vsub.f32 %v541, %v587
    %v617 = vsub.f32 %v542, %v589
    %v618 = vsub.f32 %v543, %v591
    %v619 = vsub.f32 %v544, %v593
    %v620 = vsub.f32 %v545, %v595
    %v621 = vmul.f32 %v596, 1.442695
    %v622 = vpow.pop %v621
    %v623 = vmul.f32 %v597, 1.442695
    %v624 = vpow.pop %v623
    %v625 = vmul.f32 %v598, 1.442695
    %v626 = vpow.pop %v625
    %v627 = vmul.f32 %v599, 1.442695
    %v628 = vpow.pop %v627
    %v629 = vmul.f32 %v600, 1.442695
    %v630 = vpow.pop %v629
    %v631 = vmul.f32 %v601, 1.442695
    %v632 = vpow.pop %v631
    %v633 = vmul.f32 %v602, 1.442695
    %v634 = vpow.pop %v633
    %v635 = vmul.f32 %v603, 1.442695
    %v636 = vpow.pop %v635
    %v637 = vmul.f32 %v604, 1.442695
    %v638 = vpow.pop %v637
    %v639 = vmul.f32 %v605, 1.442695
    %v640 = vpow.pop %v639
    %v641 = vmul.f32 %v606, 1.442695
    %v642 = vpow.pop %v641
    %v643 = vmul.f32 %v607, 1.442695
    %v644 = vpow.pop %v643
    %v645 = vmul.f32 %v608, 1.442695
    %v646 = vpow.pop %v645
    %v647 = vmul.f32 %v609, 1.442695
    %v648 = vpow.pop %v647
    %v649 = vmul.f32 %v610, 1.442695
    %v650 = vpow.pop %v649
    %v651 = vmul.f32 %v611, 1.442695
    %v652 = vpow.pop %v651
    %v653 = vmul.f32 %v612, 1.442695
    %v654 = vpow.pop %v653
    %v655 = vmul.f32 %v613, 1.442695
    %v656 = vpow.pop %v655
    %v657 = vmul.f32 %v614, 1.442695
    %v658 = vpow.pop %v657
    %v659 = vmul.f32 %v615, 1.442695
    %v660 = vpow.pop %v659
    %v661 = vmul.f32 %v616, 1.442695
    %v662 = vpow.pop %v661
    %v663 = vmul.f32 %v617, 1.442695
    %v664 = vpow.pop %v663
    %v665 = vmul.f32 %v618, 1.442695
    %v666 = vpow.pop %v665
    %v667 = vmul.f32 %v619, 1.442695
    %v668 = vpow.pop %v667
    %v669 = vmul.f32 %v620, 1.442695
    %v670 = vpow.pop %v669
    %671 = vadd.xlane.f32.xlu0 %v622
    %v672 = vpop.xlane.xlu0 %671
    %673 = vadd.xlane.f32.xlu0 %v624
    %v674 = vpop.xlane.xlu0 %673
    %675 = vadd.xlane.f32.xlu0 %v626
    %v676 = vpop.xlane.xlu0 %675
    %677 = vadd.xlane.f32.xlu0 %v628
    %v678 = vpop.xlane.xlu0 %677
    %679 = vadd.xlane.f32.xlu0 %v630
    %v680 = vpop.xlane.xlu0 %679
    %681 = vadd.xlane.f32.xlu0 %v632
    %v682 = vpop.xlane.xlu0 %681
    %683 = vadd.xlane.f32.xlu0 %v634
    %v684 = vpop.xlane.xlu0 %683
    %685 = vadd.xlane.f32.xlu0 %v636
    %v686 = vpop.xlane.xlu0 %685
    %687 = vadd.xlane.f32.xlu0 %v638
    %v688 = vpop.xlane.xlu0 %687
    %689 = vadd.xlane.f32.xlu0 %v640
    %v690 = vpop.xlane.xlu0 %689
    %691 = vadd.xlane.f32.xlu0 %v642
    %v692 = vpop.xlane.xlu0 %691
    %693 = vadd.xlane.f32.xlu0 %v644
    %v694 = vpop.xlane.xlu0 %693
    %695 = vadd.xlane.f32.xlu0 %v646
    %v696 = vpop.xlane.xlu0 %695
    %697 = vadd.xlane.f32.xlu0 %v648
    %v698 = vpop.xlane.xlu0 %697
    %699 = vadd.xlane.f32.xlu0 %v650
    %v700 = vpop.xlane.xlu0 %699
    %701 = vadd.xlane.f32.xlu0 %v652
    %v702 = vpop.xlane.xlu0 %701
    %703 = vadd.xlane.f32.xlu0 %v654
    %v704 = vpop.xlane.xlu0 %703
    %705 = vadd.xlane.f32.xlu0 %v656
    %v706 = vpop.xlane.xlu0 %705
    %707 = vadd.xlane.f32.xlu0 %v658
    %v708 = vpop.xlane.xlu0 %707
    %709 = vadd.xlane.f32.xlu0 %v660
    %v710 = vpop.xlane.xlu0 %709
    %711 = vadd.xlane.f32.xlu0 %v662
    %v712 = vpop.xlane.xlu0 %711
    %713 = vadd.xlane.f32.xlu0 %v664
    %v714 = vpop.xlane.xlu0 %713
    %715 = vadd.xlane.f32.xlu0 %v666
    %v716 = vpop.xlane.xlu0 %715
    %717 = vadd.xlane.f32.xlu0 %v668
    %v718 = vpop.xlane.xlu0 %717
    %719 = vadd.xlane.f32.xlu0 %v670
    %v720 = vpop.xlane.xlu0 %719
    %v721 = vrcp.pop %v672
    %v722 = vmul.f32 %v672, %v721
    %v723 = vsub.f32 1.0, %v722
    %v724 = vmul.f32 %v721, %v723
    %v725 = vadd.f32 %v721, %v724
    %vm726 = vweird.f32 %v672
    %vm727 = vweird.f32 %v721
    %vm728 = vmor %vm726, %vm727
    %v729 = vsel %vm728, %v721, %v725
    %v730 = vand.u32 2147483647, %v672
    %vm731 = vcmp.eq.f32.partialorder %v730, 8.507059e+37
    %v732 = vand.u32 %v672, 2147483648
    %v733 = vor.u32 1.1754944e-38, %v732
    %v734 = vsel %vm731, %v733, %v729
    %v735 = vmul.f32 %v622, %v734
    %v736 = vrcp.pop %v674
    %v737 = vmul.f32 %v674, %v736
    %v738 = vsub.f32 1.0, %v737
    %v739 = vmul.f32 %v736, %v738
    %v740 = vadd.f32 %v736, %v739
    %vm741 = vweird.f32 %v674
    %vm742 = vweird.f32 %v736
    %vm743 = vmor %vm741, %vm742
    %v744 = vsel %vm743, %v736, %v740
    %v745 = vand.u32 2147483647, %v674
    %vm746 = vcmp.eq.f32.partialorder %v745, 8.507059e+37
    %v747 = vand.u32 %v674, 2147483648
    %v748 = vor.u32 1.1754944e-38, %v747
    %v749 = vsel %vm746, %v748, %v744
    %v750 = vmul.f32 %v624, %v749
    %v751 = vrcp.pop %v676
    %v752 = vmul.f32 %v676, %v751
    %v753 = vsub.f32 1.0, %v752
    %v754 = vmul.f32 %v751, %v753
    %v755 = vadd.f32 %v751, %v754
    %vm756 = vweird.f32 %v676
    %vm757 = vweird.f32 %v751
    %vm758 = vmor %vm756, %vm757
    %v759 = vsel %vm758, %v751, %v755
    %v760 = vand.u32 2147483647, %v676
    %vm761 = vcmp.eq.f32.partialorder %v760, 8.507059e+37
    %v762 = vand.u32 %v676, 2147483648
    %v763 = vor.u32 1.1754944e-38, %v762
    %v764 = vsel %vm761, %v763, %v759
    %v765 = vmul.f32 %v626, %v764
    %v766 = vrcp.pop %v678
    %v767 = vmul.f32 %v678, %v766
    %v768 = vsub.f32 1.0, %v767
    %v769 = vmul.f32 %v766, %v768
    %v770 = vadd.f32 %v766, %v769
    %vm771 = vweird.f32 %v678
    %vm772 = vweird.f32 %v766
    %vm773 = vmor %vm771, %vm772
    %v774 = vsel %vm773, %v766, %v770
    %v775 = vand.u32 2147483647, %v678
    %vm776 = vcmp.eq.f32.partialorder %v775, 8.507059e+37
    %v777 = vand.u32 %v678, 2147483648
    %v778 = vor.u32 1.1754944e-38, %v777
    %v779 = vsel %vm776, %v778, %v774
    %v780 = vmul.f32 %v628, %v779
    %v781 = vrcp.pop %v680
    %v782 = vmul.f32 %v680, %v781
    %v783 = vsub.f32 1.0, %v782
    %v784 = vmul.f32 %v781, %v783
    %v785 = vadd.f32 %v781, %v784
    %vm786 = vweird.f32 %v680
    %vm787 = vweird.f32 %v781
    %vm788 = vmor %vm786, %vm787
    %v789 = vsel %vm788, %v781, %v785
    %v790 = vand.u32 2147483647, %v680
    %vm791 = vcmp.eq.f32.partialorder %v790, 8.507059e+37
    %v792 = vand.u32 %v680, 2147483648
    %v793 = vor.u32 1.1754944e-38, %v792
    %v794 = vsel %vm791, %v793, %v789
    %v795 = vmul.f32 %v630, %v794
    %v796 = vrcp.pop %v682
    %v797 = vmul.f32 %v682, %v796
    %v798 = vsub.f32 1.0, %v797
    %v799 = vmul.f32 %v796, %v798
    %v800 = vadd.f32 %v796, %v799
    %vm801 = vweird.f32 %v682
    %vm802 = vweird.f32 %v796
    %vm803 = vmor %vm801, %vm802
    %v804 = vsel %vm803, %v796, %v800
    %v805 = vand.u32 2147483647, %v682
    %vm806 = vcmp.eq.f32.partialorder %v805, 8.507059e+37
    %v807 = vand.u32 %v682, 2147483648
    %v808 = vor.u32 1.1754944e-38, %v807
    %v809 = vsel %vm806, %v808, %v804
    %v810 = vmul.f32 %v632, %v809
    %v811 = vrcp.pop %v684
    %v812 = vmul.f32 %v684, %v811
    %v813 = vsub.f32 1.0, %v812
    %v814 = vmul.f32 %v811, %v813
    %v815 = vadd.f32 %v811, %v814
    %vm816 = vweird.f32 %v684
    %vm817 = vweird.f32 %v811
    %vm818 = vmor %vm816, %vm817
    %v819 = vsel %vm818, %v811, %v815
    %v820 = vand.u32 2147483647, %v684
    %vm821 = vcmp.eq.f32.partialorder %v820, 8.507059e+37
    %v822 = vand.u32 %v684, 2147483648
    %v823 = vor.u32 1.1754944e-38, %v822
    %v824 = vsel %vm821, %v823, %v819
    %v825 = vmul.f32 %v634, %v824
    %v826 = vrcp.pop %v686
    %v827 = vmul.f32 %v686, %v826
    %v828 = vsub.f32 1.0, %v827
    %v829 = vmul.f32 %v826, %v828
    %v830 = vadd.f32 %v826, %v829
    %vm831 = vweird.f32 %v686
    %vm832 = vweird.f32 %v826
    %vm833 = vmor %vm831, %vm832
    %v834 = vsel %vm833, %v826, %v830
    %v835 = vand.u32 2147483647, %v686
    %vm836 = vcmp.eq.f32.partialorder %v835, 8.507059e+37
    %v837 = vand.u32 %v686, 2147483648
    %v838 = vor.u32 1.1754944e-38, %v837
    %v839 = vsel %vm836, %v838, %v834
    %v840 = vmul.f32 %v636, %v839
    %v841 = vrcp.pop %v688
    %v842 = vmul.f32 %v688, %v841
    %v843 = vsub.f32 1.0, %v842
    %v844 = vmul.f32 %v841, %v843
    %v845 = vadd.f32 %v841, %v844
    %vm846 = vweird.f32 %v688
    %vm847 = vweird.f32 %v841
    %vm848 = vmor %vm846, %vm847
    %v849 = vsel %vm848, %v841, %v845
    %v850 = vand.u32 2147483647, %v688
    %vm851 = vcmp.eq.f32.partialorder %v850, 8.507059e+37
    %v852 = vand.u32 %v688, 2147483648
    %v853 = vor.u32 1.1754944e-38, %v852
    %v854 = vsel %vm851, %v853, %v849
    %v855 = vmul.f32 %v638, %v854
    %v856 = vrcp.pop %v690
    %v857 = vmul.f32 %v690, %v856
    %v858 = vsub.f32 1.0, %v857
    %v859 = vmul.f32 %v856, %v858
    %v860 = vadd.f32 %v856, %v859
    %vm861 = vweird.f32 %v690
    %vm862 = vweird.f32 %v856
    %vm863 = vmor %vm861, %vm862
    %v864 = vsel %vm863, %v856, %v860
    %v865 = vand.u32 2147483647, %v690
    %vm866 = vcmp.eq.f32.partialorder %v865, 8.507059e+37
    %v867 = vand.u32 %v690, 2147483648
    %v868 = vor.u32 1.1754944e-38, %v867
    %v869 = vsel %vm866, %v868, %v864
    %v870 = vmul.f32 %v640, %v869
    %v871 = vrcp.pop %v692
    %v872 = vmul.f32 %v692, %v871
    %v873 = vsub.f32 1.0, %v872
    %v874 = vmul.f32 %v871, %v873
    %v875 = vadd.f32 %v871, %v874
    %vm876 = vweird.f32 %v692
    %vm877 = vweird.f32 %v871
    %vm878 = vmor %vm876, %vm877
    %v879 = vsel %vm878, %v871, %v875
    %v880 = vand.u32 2147483647, %v692
    %vm881 = vcmp.eq.f32.partialorder %v880, 8.507059e+37
    %v882 = vand.u32 %v692, 2147483648
    %v883 = vor.u32 1.1754944e-38, %v882
    %v884 = vsel %vm881, %v883, %v879
    %v885 = vmul.f32 %v642, %v884
    %v886 = vrcp.pop %v694
    %v887 = vmul.f32 %v694, %v886
    %v888 = vsub.f32 1.0, %v887
    %v889 = vmul.f32 %v886, %v888
    %v890 = vadd.f32 %v886, %v889
    %vm891 = vweird.f32 %v694
    %vm892 = vweird.f32 %v886
    %vm893 = vmor %vm891, %vm892
    %v894 = vsel %vm893, %v886, %v890
    %v895 = vand.u32 2147483647, %v694
    %vm896 = vcmp.eq.f32.partialorder %v895, 8.507059e+37
    %v897 = vand.u32 %v694, 2147483648
    %v898 = vor.u32 1.1754944e-38, %v897
    %v899 = vsel %vm896, %v898, %v894
    %v900 = vmul.f32 %v644, %v899
    %v901 = vrcp.pop %v696
    %v902 = vmul.f32 %v696, %v901
    %v903 = vsub.f32 1.0, %v902
    %v904 = vmul.f32 %v901, %v903
    %v905 = vadd.f32 %v901, %v904
    %vm906 = vweird.f32 %v696
    %vm907 = vweird.f32 %v901
    %vm908 = vmor %vm906, %vm907
    %v909 = vsel %vm908, %v901, %v905
    %v910 = vand.u32 2147483647, %v696
    %vm911 = vcmp.eq.f32.partialorder %v910, 8.507059e+37
    %v912 = vand.u32 %v696, 2147483648
    %v913 = vor.u32 1.1754944e-38, %v912
    %v914 = vsel %vm911, %v913, %v909
    %v915 = vmul.f32 %v646, %v914
    %v916 = vrcp.pop %v698
    %v917 = vmul.f32 %v698, %v916
    %v918 = vsub.f32 1.0, %v917
    %v919 = vmul.f32 %v916, %v918
    %v920 = vadd.f32 %v916, %v919
    %vm921 = vweird.f32 %v698
    %vm922 = vweird.f32 %v916
    %vm923 = vmor %vm921, %vm922
    %v924 = vsel %vm923, %v916, %v920
    %v925 = vand.u32 2147483647, %v698
    %vm926 = vcmp.eq.f32.partialorder %v925, 8.507059e+37
    %v927 = vand.u32 %v698, 2147483648
    %v928 = vor.u32 1.1754944e-38, %v927
    %v929 = vsel %vm926, %v928, %v924
    %v930 = vmul.f32 %v648, %v929
    %v931 = vrcp.pop %v700
    %v932 = vmul.f32 %v700, %v931
    %v933 = vsub.f32 1.0, %v932
    %v934 = vmul.f32 %v931, %v933
    %v935 = vadd.f32 %v931, %v934
    %vm936 = vweird.f32 %v700
    %vm937 = vweird.f32 %v931
    %vm938 = vmor %vm936, %vm937
    %v939 = vsel %vm938, %v931, %v935
    %v940 = vand.u32 2147483647, %v700
    %vm941 = vcmp.eq.f32.partialorder %v940, 8.507059e+37
    %v942 = vand.u32 %v700, 2147483648
    %v943 = vor.u32 1.1754944e-38, %v942
    %v944 = vsel %vm941, %v943, %v939
    %v945 = vmul.f32 %v650, %v944
    %v946 = vrcp.pop %v702
    %v947 = vmul.f32 %v702, %v946
    %v948 = vsub.f32 1.0, %v947
    %v949 = vmul.f32 %v946, %v948
    %v950 = vadd.f32 %v946, %v949
    %vm951 = vweird.f32 %v702
    %vm952 = vweird.f32 %v946
    %vm953 = vmor %vm951, %vm952
    %v954 = vsel %vm953, %v946, %v950
    %v955 = vand.u32 2147483647, %v702
    %vm956 = vcmp.eq.f32.partialorder %v955, 8.507059e+37
    %v957 = vand.u32 %v702, 2147483648
    %v958 = vor.u32 1.1754944e-38, %v957
    %v959 = vsel %vm956, %v958, %v954
    %v960 = vmul.f32 %v652, %v959
    %v961 = vrcp.pop %v704
    %v962 = vmul.f32 %v704, %v961
    %v963 = vsub.f32 1.0, %v962
    %v964 = vmul.f32 %v961, %v963
    %v965 = vadd.f32 %v961, %v964
    %vm966 = vweird.f32 %v704
    %vm967 = vweird.f32 %v961
    %vm968 = vmor %vm966, %vm967
    %v969 = vsel %vm968, %v961, %v965
    %v970 = vand.u32 2147483647, %v704
    %vm971 = vcmp.eq.f32.partialorder %v970, 8.507059e+37
    %v972 = vand.u32 %v704, 2147483648
    %v973 = vor.u32 1.1754944e-38, %v972
    %v974 = vsel %vm971, %v973, %v969
    %v975 = vmul.f32 %v654, %v974
    %v976 = vrcp.pop %v706
    %v977 = vmul.f32 %v706, %v976
    %v978 = vsub.f32 1.0, %v977
    %v979 = vmul.f32 %v976, %v978
    %v980 = vadd.f32 %v976, %v979
    %vm981 = vweird.f32 %v706
    %vm982 = vweird.f32 %v976
    %vm983 = vmor %vm981, %vm982
    %v984 = vsel %vm983, %v976, %v980
    %v985 = vand.u32 2147483647, %v706
    %vm986 = vcmp.eq.f32.partialorder %v985, 8.507059e+37
    %v987 = vand.u32 %v706, 2147483648
    %v988 = vor.u32 1.1754944e-38, %v987
    %v989 = vsel %vm986, %v988, %v984
    %v990 = vmul.f32 %v656, %v989
    %v991 = vrcp.pop %v708
    %v992 = vmul.f32 %v708, %v991
    %v993 = vsub.f32 1.0, %v992
    %v994 = vmul.f32 %v991, %v993
    %v995 = vadd.f32 %v991, %v994
    %vm996 = vweird.f32 %v708
    %vm997 = vweird.f32 %v991
    %vm998 = vmor %vm996, %vm997
    %v999 = vsel %vm998, %v991, %v995
    %v1000 = vand.u32 2147483647, %v708
    %vm1001 = vcmp.eq.f32.partialorder %v1000, 8.507059e+37
    %v1002 = vand.u32 %v708, 2147483648
    %v1003 = vor.u32 1.1754944e-38, %v1002
    %v1004 = vsel %vm1001, %v1003, %v999
    %v1005 = vmul.f32 %v658, %v1004
    %v1006 = vrcp.pop %v710
    %v1007 = vmul.f32 %v710, %v1006
    %v1008 = vsub.f32 1.0, %v1007
    %v1009 = vmul.f32 %v1006, %v1008
    %v1010 = vadd.f32 %v1006, %v1009
    %vm1011 = vweird.f32 %v710
    %vm1012 = vweird.f32 %v1006
    %vm1013 = vmor %vm1011, %vm1012
    %v1014 = vsel %vm1013, %v1006, %v1010
    %v1015 = vand.u32 2147483647, %v710
    %vm1016 = vcmp.eq.f32.partialorder %v1015, 8.507059e+37
    %v1017 = vand.u32 %v710, 2147483648
    %v1018 = vor.u32 1.1754944e-38, %v1017
    %v1019 = vsel %vm1016, %v1018, %v1014
    %v1020 = vmul.f32 %v660, %v1019
    %v1021 = vrcp.pop %v712
    %v1022 = vmul.f32 %v712, %v1021
    %v1023 = vsub.f32 1.0, %v1022
    %v1024 = vmul.f32 %v1021, %v1023
    %v1025 = vadd.f32 %v1021, %v1024
    %vm1026 = vweird.f32 %v712
    %vm1027 = vweird.f32 %v1021
    %vm1028 = vmor %vm1026, %vm1027
    %v1029 = vsel %vm1028, %v1021, %v1025
    %v1030 = vand.u32 2147483647, %v712
    %vm1031 = vcmp.eq.f32.partialorder %v1030, 8.507059e+37
    %v1032 = vand.u32 %v712, 2147483648
    %v1033 = vor.u32 1.1754944e-38, %v1032
    %v1034 = vsel %vm1031, %v1033, %v1029
    %v1035 = vmul.f32 %v662, %v1034
    %v1036 = vrcp.pop %v714
    %v1037 = vmul.f32 %v714, %v1036
    %v1038 = vsub.f32 1.0, %v1037
    %v1039 = vmul.f32 %v1036, %v1038
    %v1040 = vadd.f32 %v1036, %v1039
    %vm1041 = vweird.f32 %v714
    %vm1042 = vweird.f32 %v1036
    %vm1043 = vmor %vm1041, %vm1042
    %v1044 = vsel %vm1043, %v1036, %v1040
    %v1045 = vand.u32 2147483647, %v714
    %vm1046 = vcmp.eq.f32.partialorder %v1045, 8.507059e+37
    %v1047 = vand.u32 %v714, 2147483648
    %v1048 = vor.u32 1.1754944e-38, %v1047
    %v1049 = vsel %vm1046, %v1048, %v1044
    %v1050 = vmul.f32 %v664, %v1049
    %v1051 = vrcp.pop %v716
    %v1052 = vmul.f32 %v716, %v1051
    %v1053 = vsub.f32 1.0, %v1052
    %v1054 = vmul.f32 %v1051, %v1053
    %v1055 = vadd.f32 %v1051, %v1054
    %vm1056 = vweird.f32 %v716
    %vm1057 = vweird.f32 %v1051
    %vm1058 = vmor %vm1056, %vm1057
    %v1059 = vsel %vm1058, %v1051, %v1055
    %v1060 = vand.u32 2147483647, %v716
    %vm1061 = vcmp.eq.f32.partialorder %v1060, 8.507059e+37
    %v1062 = vand.u32 %v716, 2147483648
    %v1063 = vor.u32 1.1754944e-38, %v1062
    %v1064 = vsel %vm1061, %v1063, %v1059
    %v1065 = vmul.f32 %v666, %v1064
    %v1066 = vrcp.pop %v718
    %v1067 = vmul.f32 %v718, %v1066
    %v1068 = vsub.f32 1.0, %v1067
    %v1069 = vmul.f32 %v1066, %v1068
    %v1070 = vadd.f32 %v1066, %v1069
    %vm1071 = vweird.f32 %v718
    %vm1072 = vweird.f32 %v1066
    %vm1073 = vmor %vm1071, %vm1072
    %v1074 = vsel %vm1073, %v1066, %v1070
    %v1075 = vand.u32 2147483647, %v718
    %vm1076 = vcmp.eq.f32.partialorder %v1075, 8.507059e+37
    %v1077 = vand.u32 %v718, 2147483648
    %v1078 = vor.u32 1.1754944e-38, %v1077
    %v1079 = vsel %vm1076, %v1078, %v1074
    %v1080 = vmul.f32 %v668, %v1079
    %v1081 = vrcp.pop %v720
    %v1082 = vmul.f32 %v720, %v1081
    %v1083 = vsub.f32 1.0, %v1082
    %v1084 = vmul.f32 %v1081, %v1083
    %v1085 = vadd.f32 %v1081, %v1084
    %vm1086 = vweird.f32 %v720
    %vm1087 = vweird.f32 %v1081
    %vm1088 = vmor %vm1086, %vm1087
    %v1089 = vsel %vm1088, %v1081, %v1085
    %v1090 = vand.u32 2147483647, %v720
    %vm1091 = vcmp.eq.f32.partialorder %v1090, 8.507059e+37
    %v1092 = vand.u32 %v720, 2147483648
    %v1093 = vor.u32 1.1754944e-38, %v1092
    %v1094 = vsel %vm1091, %v1093, %v1089
    %v1095 = vmul.f32 %v670, %v1094
    %v1096 = vtanh.pop %v444
    %v1097 = vtanh.pop %v447
    %v1098 = vtanh.pop %v450
    %v1099 = vtanh.pop %v453
    %v1100 = vtanh.pop %v456
    %v1101 = vtanh.pop %v459
    %v1102 = vtanh.pop %v462
    %v1103 = vtanh.pop %v465
    %v1104 = vtanh.pop %v468
    %v1105 = vtanh.pop %v471
    %v1106 = vtanh.pop %v474
    %v1107 = vtanh.pop %v477
    %v1108 = vtanh.pop %v480
    %v1109 = vtanh.pop %v483
    %v1110 = vtanh.pop %v486
    %v1111 = vtanh.pop %v489
    %v1112 = vtanh.pop %v492
    %v1113 = vtanh.pop %v495
    %v1114 = vtanh.pop %v498
    %v1115 = vtanh.pop %v501
    %v1116 = vtanh.pop %v504
    %v1117 = vtanh.pop %v507
    %v1118 = vtanh.pop %v510
    %v1119 = vtanh.pop %v513
    %v1120 = vtanh.pop %v516
    %vm1121 = vcmp.eq.s32.totalorder %v519, 16
    %1123 = vset.pattern.permute.xlu0 16
    %1124 = vperm.xlu0 %1123, %v1096
    %v1125 = vpop.permute.xlu0 %1124
    %1128 = vset.pattern.permute.xlu0 16
    %1129 = vperm.xlu0 %1128, %v1097
    %v1130 = vpop.permute.xlu0 %1129
    %1133 = vset.pattern.permute.xlu0 16
    %1134 = vperm.xlu0 %1133, %v1098
    %v1135 = vpop.permute.xlu0 %1134
    %1138 = vset.pattern.permute.xlu0 16
    %1139 = vperm.xlu0 %1138, %v1099
    %v1140 = vpop.permute.xlu0 %1139
    %1143 = vset.pattern.permute.xlu0 16
    %1144 = vperm.xlu0 %1143, %v1100
    %v1145 = vpop.permute.xlu0 %1144
    %1148 = vset.pattern.permute.xlu0 16
    %1149 = vperm.xlu0 %1148, %v1101
    %v1150 = vpop.permute.xlu0 %1149
    %1153 = vset.pattern.permute.xlu0 16
    %1154 = vperm.xlu0 %1153, %v1102
    %v1155 = vpop.permute.xlu0 %1154
    %1158 = vset.pattern.permute.xlu0 16
    %1159 = vperm.xlu0 %1158, %v1103
    %v1160 = vpop.permute.xlu0 %1159
    %1163 = vset.pattern.permute.xlu0 16
    %1164 = vperm.xlu0 %1163, %v1104
    %v1165 = vpop.permute.xlu0 %1164
    %1168 = vset.pattern.permute.xlu0 16
    %1169 = vperm.xlu0 %1168, %v1105
    %v1170 = vpop.permute.xlu0 %1169
    %1173 = vset.pattern.permute.xlu0 16
    %1174 = vperm.xlu0 %1173, %v1106
    %v1175 = vpop.permute.xlu0 %1174
    %1178 = vset.pattern.permute.xlu0 16
    %1179 = vperm.xlu0 %1178, %v1107
    %v1180 = vpop.permute.xlu0 %1179
    %1183 = vset.pattern.permute.xlu0 16
    %1184 = vperm.xlu0 %1183, %v1108
    %v1185 = vpop.permute.xlu0 %1184
    %1188 = vset.pattern.permute.xlu0 16
    %1189 = vperm.xlu0 %1188, %v1109
    %v1190 = vpop.permute.xlu0 %1189
    %1193 = vset.pattern.permute.xlu0 16
    %1194 = vperm.xlu0 %1193, %v1110
    %v1195 = vpop.permute.xlu0 %1194
    %1198 = vset.pattern.permute.xlu0 16
    %1199 = vperm.xlu0 %1198, %v1111
    %v1200 = vpop.permute.xlu0 %1199
    %1203 = vset.pattern.permute.xlu0 16
    %1204 = vperm.xlu0 %1203, %v1112
    %v1205 = vpop.permute.xlu0 %1204
    %1208 = vset.pattern.permute.xlu0 16
    %1209 = vperm.xlu0 %1208, %v1113
    %v1210 = vpop.permute.xlu0 %1209
    %1213 = vset.pattern.permute.xlu0 16
    %1214 = vperm.xlu0 %1213, %v1114
    %v1215 = vpop.permute.xlu0 %1214
    %1218 = vset.pattern.permute.xlu0 16
    %1219 = vperm.xlu0 %1218, %v1115
    %v1220 = vpop.permute.xlu0 %1219
    %1223 = vset.pattern.permute.xlu0 16
    %1224 = vperm.xlu0 %1223, %v1116
    %v1225 = vpop.permute.xlu0 %1224
    %1228 = vset.pattern.permute.xlu0 16
    %1229 = vperm.xlu0 %1228, %v1117
    %v1230 = vpop.permute.xlu0 %1229
    %1233 = vset.pattern.permute.xlu0 16
    %1234 = vperm.xlu0 %1233, %v1118
    %v1235 = vpop.permute.xlu0 %1234
    %1238 = vset.pattern.permute.xlu0 16
    %1239 = vperm.xlu0 %1238, %v1119
    %v1240 = vpop.permute.xlu0 %1239
    %1243 = vset.pattern.permute.xlu0 16
    %1244 = vperm.xlu0 %1243, %v1120
    %v1245 = vpop.permute.xlu0 %1244
    %v1247 = vsel %vm1121, %v1125, %v735
    %v1248 = vsel %vm1121, %v1130, %v750
    %v1249 = vsel %vm1121, %v1135, %v765
    %v1250 = vsel %vm1121, %v1140, %v780
    %v1251 = vsel %vm1121, %v1145, %v795
    %v1252 = vsel %vm1121, %v1150, %v810
    %v1253 = vsel %vm1121, %v1155, %v825
    %v1254 = vsel %vm1121, %v1160, %v840
    %v1255 = vsel %vm1121, %v1165, %v855
    %v1256 = vsel %vm1121, %v1170, %v870
    %v1257 = vsel %vm1121, %v1175, %v885
    %v1258 = vsel %vm1121, %v1180, %v900
    %v1259 = vsel %vm1121, %v1185, %v915
    %v1260 = vsel %vm1121, %v1190, %v930
    %v1261 = vsel %vm1121, %v1195, %v945
    %v1262 = vsel %vm1121, %v1200, %v960
    %v1263 = vsel %vm1121, %v1205, %v975
    %v1264 = vsel %vm1121, %v1210, %v990
    %v1265 = vsel %vm1121, %v1215, %v1005
    %v1266 = vsel %vm1121, %v1220, %v1020
    %v1267 = vsel %vm1121, %v1225, %v1035
    %v1268 = vsel %vm1121, %v1230, %v1050
    %v1269 = vsel %vm1121, %v1235, %v1065
    %v1270 = vsel %vm1121, %v1240, %v1080
    %v1271 = vsel %vm1121, %v1245, %v1095
    %1272 = vst [vmem:[#allocation5] sm:$0xff] %v1247
    %1273 = vst [vmem:[#allocation5 + $0x8] sm:$0xff] %v1248
    %1274 = vst [vmem:[#allocation5 + $0x10] sm:$0xff] %v1249
    %1275 = vst [vmem:[#allocation5 + $0x18] sm:$0xff] %v1250
    %1276 = vst [vmem:[#allocation5 + $0x20] sm:$0xff] %v1251
    %1277 = vst [vmem:[#allocation5 + $0x28] sm:$0xff] %v1252
    %1278 = vst [vmem:[#allocation5 + $0x30] sm:$0xff] %v1253
    %1279 = vst [vmem:[#allocation5 + $0x38] sm:$0xff] %v1254
    %1280 = vst [vmem:[#allocation5 + $0x40] sm:$0xff] %v1255
    %1281 = vst [vmem:[#allocation5 + $0x48] sm:$0xff] %v1256
    %1282 = vst [vmem:[#allocation5 + $0x50] sm:$0xff] %v1257
    %1283 = vst [vmem:[#allocation5 + $0x58] sm:$0xff] %v1258
    %1284 = vst [vmem:[#allocation5 + $0x60] sm:$0xff] %v1259
    %1285 = vst [vmem:[#allocation5 + $0x68] sm:$0xff] %v1260
    %1286 = vst [vmem:[#allocation5 + $0x70] sm:$0xff] %v1261
    %1287 = vst [vmem:[#allocation5 + $0x78] sm:$0xff] %v1262
    %1288 = vst [vmem:[#allocation5 + $0x80] sm:$0xff] %v1263
    %1289 = vst [vmem:[#allocation5 + $0x88] sm:$0xff] %v1264
    %1290 = vst [vmem:[#allocation5 + $0x90] sm:$0xff] %v1265
    %1291 = vst [vmem:[#allocation5 + $0x98] sm:$0xff] %v1266
    %1292 = vst [vmem:[#allocation5 + $0xa0] sm:$0xff] %v1267
    %1293 = vst [vmem:[#allocation5 + $0xa8] sm:$0xff] %v1268
    %1294 = vst [vmem:[#allocation5 + $0xb0] sm:$0xff] %v1269
    %1295 = vst [vmem:[#allocation5 + $0xb8] sm:$0xff] %v1270
    %1296 = vst [vmem:[#allocation5 + $0xc0] sm:$0xff] %v1271
    // Predicated region
    $region34: #{tpu_custom_call.1} parent=1 // pred_check
      _
    $region35: #{tpu_custom_call.1} parent=1 // pred_check_branch
      %1298 = sbr.rel (0) target = $region37
    $region36: #{tpu_custom_call.1} parent=1 // pred_region
      %1300 = vsyncadd [#allocation4], 0
      %s1301 = sshll.u32 [#allocation5], 4
      %s1302 = int_to_ptr.vmem [resolvable:$true] %s1301
      %s1303 = sshll.u32 %s7, 4
      %s1304 = int_to_ptr.hbm [resolvable:$true] %s1303
      %1309 = dma.vmem_to_hbm [thread:$0]  %s1302, 3200, %s1304, [#allocation4], 128, 128, 8
    $region37: #{tpu_custom_call.1} parent=1 // pred_fallthru
      _
    // Predicated region
    $region38: #{tpu_custom_call.1} parent=1 // pred_check
      _
    $region39: #{tpu_custom_call.1} parent=1 // pred_check_branch
      %1311 = sbr.rel (0) target = $region41
    $region40: #{tpu_custom_call.1} parent=1 // pred_region
      %1313 = dma.done [#allocation4], 3200
    $region41: #{tpu_custom_call.1} parent=1 // pred_fallthru
      _
    %1314 = vsyncpa [#allocation3], 1
    %1315 = vsyncpa [#allocation4], 1

</llo_original>
